<compile_context>
chip_gen: v7x
topology: tpu7x:2x2x1
jax: 0.10.0
libtpu: 0.0.40
codegen_flags: <defaults>
</compile_context>

<pallas_src>
import jax
import jax.numpy as jnp
from jax.experimental import pallas as pl
from jax.experimental.pallas import tpu as pltpu

# Small but tile-aligned sizes (multiples of the (8,128)/(16,128) vreg tiles).
BATCH = 16         # batch_size
TB = BATCH         # batch tile per grid step -> single grid step at this size
SEQ = 8            # seq_len
HIDDEN = 128       # stand-in for pretrained_model.config.hidden_size (768 in BERT)
EMBED = 128        # embedding_size (lane-dense: multiple of 128)
VOCAB = 512        # stand-in vocab
PAD_TOKEN_ID = 0   # tokenizer.pad_token_id stand-in
EPS = 1e-5         # nn.LayerNorm default eps

# Rows of the stacked parameter array (sublane-padded to 8 rows).
ROW_BIAS, ROW_GAMMA, ROW_BETA = 0, 1, 2


def proj_layernorm_kernel(cls_ref, w_ref, p_ref, out_ref):
    """Fused [CLS] projection (Linear) + LayerNorm for one batch tile.

    cls_ref: [TB, H]  bf16  CLS-token hidden states
    w_ref:   [H, E]   bf16  projection weight (resident across batch tiles)
    p_ref:   [8, E]   f32   stacked params: row0=bias, row1=ln_gamma, row2=ln_beta
    out_ref: [TB, E]  f32
    """
    # Linear projection on the MXU: bf16 inputs, f32 accumulation.
    y = jnp.dot(cls_ref[...], w_ref[...], preferred_element_type=jnp.float32)

    # Load each parameter row exactly once and reuse (no per-use re-broadcast).
    bias = p_ref[ROW_BIAS:ROW_BIAS + 1, :]
    gamma = p_ref[ROW_GAMMA:ROW_GAMMA + 1, :]
    beta = p_ref[ROW_BETA:ROW_BETA + 1, :]

    # Bias must be added BEFORE LayerNorm stats (it affects mean/var).
    y = y + bias

    # LayerNorm over the embedding dim, biased variance (PyTorch semantics), f32.
    mean = jnp.mean(y, axis=-1, keepdims=True)
    centered = y - mean
    var = jnp.mean(centered * centered, axis=-1, keepdims=True)
    normed = centered * jax.lax.rsqrt(var + EPS)
    out_ref[...] = (normed * gamma + beta).astype(out_ref.dtype)


def hf_language_repr_forward(token_ids, params):
    """Mirrors HFLanguageRepresentationNetwork.forward(x)."""
    # attention_mask = x != pad_token_id (only consumed by the real encoder).
    attention_mask = token_ids != PAD_TOKEN_ID
    del attention_mask

    # TODO(synk): the pretrained HF BERT encoder cannot be reproduced without
    # its checkpoint; substitute a deterministic embedding-lookup stub.  Only
    # the [CLS] (position-0) embeddings are gathered, so no [B, S, H] slab is
    # materialized in HBM.  With a real encoder, take last_hidden_state[:, 0, :]
    # in the wrapper (a free XLA slice) and feed that [B, H] array here.
    cls_bh = jnp.take(params["embed_table"], token_ids[:, 0], axis=0)  # [B, H] bf16

    grid = (pl.cdiv(BATCH, TB),)  # == (1,) at these sizes
    out = pl.pallas_call(
        proj_layernorm_kernel,
        out_shape=jax.ShapeDtypeStruct((BATCH, EMBED), jnp.float32),
        grid=grid,
        in_specs=[
            # CLS hidden states, batch tiled on the grid; TB=16 -> full packed
            # (16,128) bf16 vreg tiles.
            pl.BlockSpec((TB, HIDDEN), lambda i: (i, 0)),
            # Projection weight: resident across all batch tiles.
            # (With a multi-step grid, add pipeline_mode=pl.Buffered(1).)
            pl.BlockSpec((HIDDEN, EMBED), lambda i: (0, 0)),
            # Stacked bias/gamma/beta: one small resident DMA instead of three.
            pl.BlockSpec((8, EMBED), lambda i: (0, 0)),
        ],
        out_specs=pl.BlockSpec((TB, EMBED), lambda i: (i, 0)),
        compiler_params=pltpu.CompilerParams(
            # Single grid step: no point sharding a ~1 us kernel across v7x's
            # two TensorCores; switch to ("parallel",) for production batches.
            dimension_semantics=("arbitrary",)),
    )(cls_bh, params["w_proj"], params["pvec"])
    return out


def init_params(key):
    k_embed, k_w, k_b = jax.random.split(key, 3)
    # Stacked (8, E) parameter block: row0=bias, row1=ln_gamma, row2=ln_beta.
    pvec = jnp.zeros((8, EMBED), jnp.float32)
    pvec = pvec.at[ROW_BIAS].set(
        jax.random.normal(k_b, (EMBED,), jnp.float32) * 0.01)
    pvec = pvec.at[ROW_GAMMA].set(jnp.ones((EMBED,), jnp.float32))   # LN weight init
    pvec = pvec.at[ROW_BETA].set(jnp.zeros((EMBED,), jnp.float32))   # LN bias init
    params = {
        # Synthetic stand-in for the pretrained encoder's output space (bf16,
        # as a real encoder running in bf16 would emit).
        "embed_table": (jax.random.normal(k_embed, (VOCAB, HIDDEN), jnp.float32)
                        * 0.02).astype(jnp.bfloat16),
        # embed_proj_head = nn.Linear(hidden_size, embedding_size); bf16 for MXU.
        "w_proj": (jax.random.normal(k_w, (HIDDEN, EMBED), jnp.float32)
                   * (1.0 / jnp.sqrt(HIDDEN))).astype(jnp.bfloat16),
        "pvec": pvec,
    }
    return params


if __name__ == "__main__":
    key = jax.random.PRNGKey(0)
    k_params, k_tokens = jax.random.split(key)
    params = init_params(k_params)

    # Input token sequence x: [batch_size, seq_len], integer token ids.
    token_ids = jax.random.randint(k_tokens, (BATCH, SEQ), 0, VOCAB, dtype=jnp.int32)

    out = hf_language_repr_forward(token_ids, params)
    out = jax.block_until_ready(out)

    # Pure-JAX reference of the same fused math (same bf16 inputs, f32 accum).
    cls = jnp.take(params["embed_table"], token_ids[:, 0], axis=0)  # [B, H] bf16
    y = jnp.dot(cls, params["w_proj"], preferred_element_type=jnp.float32)
    y = y + params["pvec"][ROW_BIAS:ROW_BIAS + 1, :]
    mean = jnp.mean(y, axis=-1, keepdims=True)
    var = jnp.mean((y - mean) ** 2, axis=-1, keepdims=True)
    ref = ((y - mean) * jax.lax.rsqrt(var + EPS)
           * params["pvec"][ROW_GAMMA:ROW_GAMMA + 1, :]
           + params["pvec"][ROW_BETA:ROW_BETA + 1, :])

    assert out.shape == (BATCH, EMBED)
    assert jnp.allclose(out, ref, atol=1e-3, rtol=1e-3)

    print("KERNEL_OK")
</pallas_src>

<mosaic_0001>
module attributes {stable_mosaic.version = 11 : i64} {
  func.func @proj_layernorm_kernel(%arg0: i32, %arg1: memref<16x128xbf16, #tpu.memory_space<vmem>>, %arg2: memref<128x128xbf16, #tpu.memory_space<vmem>>, %arg3: memref<8x128xf32, #tpu.memory_space<vmem>>, %arg4: memref<16x128xf32, #tpu.memory_space<vmem>>) attributes {dimension_semantics = [#tpu.dimension_semantics<arbitrary>], iteration_bounds = array<i64: 1>, scalar_prefetch = 0 : i64, scratch_operands = 0 : i64, tpu.core_type = #tpu.core_type<tc>, window_params = [{transform_indices = @transform_0, window_bounds = array<i64: 16, 128>}, {pipeline_mode = #tpu.pipeline_mode<synchronous>, transform_indices = @transform_1, window_bounds = array<i64: 128, 128>}, {pipeline_mode = #tpu.pipeline_mode<synchronous>, transform_indices = @transform_2, window_bounds = array<i64: 8, 128>}, {transform_indices = @transform_3, window_bounds = array<i64: 16, 128>}]} {
    %c0 = arith.constant 0 : index
    %c0_0 = arith.constant 0 : index
    %0 = vector.load %arg1[%c0, %c0_0] : memref<16x128xbf16, #tpu.memory_space<vmem>>, vector<16x128xbf16>
    %c0_1 = arith.constant 0 : index
    %c0_2 = arith.constant 0 : index
    %1 = vector.load %arg2[%c0_1, %c0_2] : memref<128x128xbf16, #tpu.memory_space<vmem>>, vector<128x128xbf16>
    %cst = arith.constant dense<0.000000e+00> : vector<16x128xf32>
    %2 = tpu.matmul %0, %1, %cst {dimension_numbers = #tpu.dot_dimension_numbers<[1], [0], [0], [1], [0, 0, 1, 1], [], []>} : vector<16x128xbf16>, vector<128x128xbf16>, vector<16x128xf32> -> vector<16x128xf32>
    %c0_3 = arith.constant 0 : index
    %c0_4 = arith.constant 0 : index
    %3 = vector.load %arg3[%c0_3, %c0_4] : memref<8x128xf32, #tpu.memory_space<vmem>>, vector<1x128xf32>
    %c1 = arith.constant 1 : index
    %c0_5 = arith.constant 0 : index
    %4 = vector.load %arg3[%c1, %c0_5] : memref<8x128xf32, #tpu.memory_space<vmem>>, vector<1x128xf32>
    %c2 = arith.constant 2 : index
    %c0_6 = arith.constant 0 : index
    %5 = vector.load %arg3[%c2, %c0_6] : memref<8x128xf32, #tpu.memory_space<vmem>>, vector<1x128xf32>
    %6 = vector.broadcast %3 : vector<1x128xf32> to vector<16x128xf32>
    %7 = arith.addf %2, %6 : vector<16x128xf32>
    %cst_7 = arith.constant dense<0.000000e+00> : vector<16xf32>
    %8 = vector.multi_reduction <add>, %7, %cst_7 [1] : vector<16x128xf32> to vector<16xf32>
    %9 = vector.shape_cast %8 : vector<16xf32> to vector<16x1xf32>
    %cst_8 = arith.constant 1.280000e+02 : f32
    %10 = vector.broadcast %cst_8 : f32 to vector<16x1xf32>
    %11 = arith.divf %9, %10 : vector<16x1xf32>
    %12 = vector.broadcast %11 : vector<16x1xf32> to vector<16x128xf32>
    %13 = arith.subf %7, %12 : vector<16x128xf32>
    %14 = arith.mulf %13, %13 : vector<16x128xf32>
    %cst_9 = arith.constant dense<0.000000e+00> : vector<16xf32>
    %15 = vector.multi_reduction <add>, %14, %cst_9 [1] : vector<16x128xf32> to vector<16xf32>
    %16 = vector.shape_cast %15 : vector<16xf32> to vector<16x1xf32>
    %cst_10 = arith.constant 1.280000e+02 : f32
    %17 = vector.broadcast %cst_10 : f32 to vector<16x1xf32>
    %18 = arith.divf %16, %17 : vector<16x1xf32>
    %cst_11 = arith.constant 9.99999974E-6 : f32
    %19 = vector.broadcast %cst_11 : f32 to vector<16x1xf32>
    %20 = arith.addf %18, %19 : vector<16x1xf32>
    %21 = math.rsqrt %20 : vector<16x1xf32>
    %22 = vector.broadcast %21 : vector<16x1xf32> to vector<16x128xf32>
    %23 = arith.mulf %13, %22 : vector<16x128xf32>
    %24 = vector.broadcast %4 : vector<1x128xf32> to vector<16x128xf32>
    %25 = arith.mulf %23, %24 : vector<16x128xf32>
    %26 = vector.broadcast %5 : vector<1x128xf32> to vector<16x128xf32>
    %27 = arith.addf %25, %26 : vector<16x128xf32>
    %c0_12 = arith.constant 0 : index
    %c0_13 = arith.constant 0 : index
    %28 = vector.load %arg4[%c0_12, %c0_13] : memref<16x128xf32, #tpu.memory_space<vmem>>, vector<16x128xf32>
    tpu.vector_store %arg4[%c0_12, %c0_13], %27 {strides = array<i32>} : memref<16x128xf32, #tpu.memory_space<vmem>>, vector<16x128xf32>,
    return
  }
  func.func @transform_0(%arg0: i32) -> (i32, i32) {
    %c0_i32 = arith.constant 0 : i32
    %c0_i32_0 = arith.constant 0 : i32
    return %arg0, %c0_i32 : i32, i32
  }
  func.func @transform_1(%arg0: i32) -> (i32, i32) {
    %c0_i32 = arith.constant 0 : i32
    %c0_i32_0 = arith.constant 0 : i32
    %c0_i32_1 = arith.constant 0 : i32
    return %c0_i32, %c0_i32_0 : i32, i32
  }
  func.func @transform_2(%arg0: i32) -> (i32, i32) {
    %c0_i32 = arith.constant 0 : i32
    %c0_i32_0 = arith.constant 0 : i32
    %c0_i32_1 = arith.constant 0 : i32
    return %c0_i32, %c0_i32_0 : i32, i32
  }
  func.func @transform_3(%arg0: i32) -> (i32, i32) {
    %c0_i32 = arith.constant 0 : i32
    %c0_i32_0 = arith.constant 0 : i32
    return %arg0, %c0_i32 : i32, i32
  }
}

</mosaic_0001>

<llo_original>
// kernel: tpu_custom_call.1
$region0: #{tpu_custom_call.1}
  #allocation0 [shape = 'u32[]', space=smem, size = 0x4, offset = 0x4, fixed_abs, tag = 'smem constant byte address 0x4 - core index']
  #allocation1 [shape = 'u32[144,128]{1,0:T(1,128)}', space=vmem, size = 0x12000, scoped, tag = 'internal scratch']
  %s0 = inlined_call_operand.hbm [shape: bf16[16,128], index: 0, kind: input, shape index: {}]
  %s1 = inlined_call_operand.hbm [shape: bf16[128,128], index: 1, kind: input, shape index: {}]
  %s2 = inlined_call_operand.hbm [shape: f32[8,128], index: 2, kind: input, shape index: {}]
  %s3 = inlined_call_operand.hbm [shape: f32[16,128], index: 3, kind: output, shape index: {}]
  %s4 = sld [smem:[#allocation0]]
  $region34: #{tpu_custom_call.1} parent=0
    _
  %s6 = ssub.s32 1, %s4
  %s7 = scalar_select 0, %s6, %s4
  $region1: #{tpu_custom_call.1} parent=0
    #allocation2 [shape = 'u8[4096]{0}', space=vmem, size = 0x1000, scoped, tag = 'input window, operand 0, single buffered']
    #allocation3 [shape = 's32[1]{0}', space=sflag, size = 0x4, scoped, tag = 'scoped memory for tpu_custom_call.1']
    #allocation4 [shape = 's32[1]{0}', space=sflag, size = 0x4, scoped, tag = 'scoped memory for tpu_custom_call.1']
    #allocation5 [shape = 'u8[32768]{0}', space=vmem, size = 0x8000, scoped, tag = 'input window, operand 1, single buffered']
    #allocation6 [shape = 's32[1]{0}', space=sflag, size = 0x4, scoped, tag = 'scoped memory for tpu_custom_call.1']
    #allocation7 [shape = 'u8[4096]{0}', space=vmem, size = 0x1000, scoped, tag = 'input window, operand 2, single buffered']
    #allocation8 [shape = 'u8[8192]{0}', space=vmem, size = 0x2000, scoped, tag = 'output window, operand 0, single buffered']
    %8 = vsyncpa [#allocation3], 0
    %9 = vsyncpa [#allocation6], 0
    %10 = vsyncpa [#allocation4], 0
    // Predicated region
    $region2: #{tpu_custom_call.1} parent=1 // pred_check
      _
    $region3: #{tpu_custom_call.1} parent=1 // pred_check_branch
      %12 = sbr.rel (0) target = $region5
    $region4: #{tpu_custom_call.1} parent=1 // pred_region
      %s14 = ssub.s32 128, 128
      %15 = vsyncadd [#allocation3], %s14
      %s16 = sshll.u32 [#allocation2], 4
      %s17 = int_to_ptr.vmem [resolvable:$true] %s16
      %22 = dma.hbm_to_vmem [thread:$0]  %s0, 128, %s17, [#allocation3], 64, 64, 4
    $region5: #{tpu_custom_call.1} parent=1 // pred_fallthru
      _
    // Predicated region
    $region6: #{tpu_custom_call.1} parent=1 // pred_check
      _
    $region7: #{tpu_custom_call.1} parent=1 // pred_check_branch
      %24 = sbr.rel (0) target = $region9
    $region8: #{tpu_custom_call.1} parent=1 // pred_region
      %s26 = ssub.s32 1024, 1024
      %27 = vsyncadd [#allocation6], %s26
      %s28 = sshll.u32 [#allocation5], 4
      %s29 = int_to_ptr.vmem [resolvable:$true] %s28
      %34 = dma.hbm_to_vmem [thread:$0]  %s1, 1024, %s29, [#allocation6], 64, 64, 4
    $region9: #{tpu_custom_call.1} parent=1 // pred_fallthru
      _
    // Predicated region
    $region10: #{tpu_custom_call.1} parent=1 // pred_check
      _
    $region11: #{tpu_custom_call.1} parent=1 // pred_check_branch
      %36 = sbr.rel (0) target = $region13
    $region12: #{tpu_custom_call.1} parent=1 // pred_region
      %s38 = ssub.s32 128, 128
      %39 = vsyncadd [#allocation6], %s38
      %s41 = sshll.u32 [#allocation7], 4
      %s42 = int_to_ptr.vmem [resolvable:$true] %s41
      %44 = dma.hbm_to_vmem [thread:$0]  %s2, 128, %s42, [#allocation6]
    $region13: #{tpu_custom_call.1} parent=1 // pred_fallthru
      _
    // Predicated region
    $region14: #{tpu_custom_call.1} parent=1 // pred_check
      _
    $region15: #{tpu_custom_call.1} parent=1 // pred_check_branch
      %46 = sbr.rel (0) target = $region17
    $region16: #{tpu_custom_call.1} parent=1 // pred_region
      %47 = dma.done [#allocation3], 128
    $region17: #{tpu_custom_call.1} parent=1 // pred_fallthru
      _
    // Predicated region
    $region18: #{tpu_custom_call.1} parent=1 // pred_check
      _
    $region19: #{tpu_custom_call.1} parent=1 // pred_check_branch
      %49 = sbr.rel (0) target = $region21
    $region20: #{tpu_custom_call.1} parent=1 // pred_region
      %50 = dma.done [#allocation6], 1024
    $region21: #{tpu_custom_call.1} parent=1 // pred_fallthru
      _
    // Predicated region
    $region22: #{tpu_custom_call.1} parent=1 // pred_check
      _
    $region23: #{tpu_custom_call.1} parent=1 // pred_check_branch
      %52 = sbr.rel (0) target = $region25
    $region24: #{tpu_custom_call.1} parent=1 // pred_region
      %53 = dma.done [#allocation6], 128
    $region25: #{tpu_custom_call.1} parent=1 // pred_fallthru
      _
    %v55 = vld [vmem:[#allocation2] sm:$0xf]
    %v56 = vld [vmem:[#allocation2 + $0x4] sm:$0xf]
    %v57 = vld [vmem:[#allocation5] sm:$0xf]
    %v58 = vld [vmem:[#allocation5 + $0x4] sm:$0xf]
    %v59 = vld [vmem:[#allocation5 + $0x8] sm:$0xf]
    %v60 = vld [vmem:[#allocation5 + $0xc] sm:$0xf]
    %v61 = vld [vmem:[#allocation5 + $0x10] sm:$0xf]
    %v62 = vld [vmem:[#allocation5 + $0x14] sm:$0xf]
    %v63 = vld [vmem:[#allocation5 + $0x18] sm:$0xf]
    %v64 = vld [vmem:[#allocation5 + $0x1c] sm:$0xf]
    %v65 = vld [vmem:[#allocation5 + $0x20] sm:$0xf]
    %v66 = vld [vmem:[#allocation5 + $0x24] sm:$0xf]
    %v67 = vld [vmem:[#allocation5 + $0x28] sm:$0xf]
    %v68 = vld [vmem:[#allocation5 + $0x2c] sm:$0xf]
    %v69 = vld [vmem:[#allocation5 + $0x30] sm:$0xf]
    %v70 = vld [vmem:[#allocation5 + $0x34] sm:$0xf]
    %v71 = vld [vmem:[#allocation5 + $0x38] sm:$0xf]
    %v72 = vld [vmem:[#allocation5 + $0x3c] sm:$0xf]
    %v73 = vld [vmem:[#allocation7] sm:$0x1]
    %v74 = vld [vmem:[#allocation7 + $0x1] sm:$0x1]
    %v75 = vld [vmem:[#allocation7 + $0x2] sm:$0x1]
    %v76 = vlaneseq
    %v77 = vshrl.u32 %v76, 7
    %v78 = vsub.s32 0, %v77
    %v79 = vrot.slane %v73, %v78
    %v82 = vunpack.c.l.b16 %v55
    %v83 = vunpack.c.l.b16 %v56
    %v84 = vpack.c.b16 %v83, %v82
    %v102 = vunpack.c.l.b16 %v57
    %v103 = vunpack.c.l.b16 %v58
    %v104 = vunpack.c.l.b16 %v59
    %v105 = vunpack.c.l.b16 %v60
    %v106 = vunpack.c.l.b16 %v61
    %v107 = vunpack.c.l.b16 %v62
    %v108 = vunpack.c.l.b16 %v63
    %v109 = vunpack.c.l.b16 %v64
    %v110 = vunpack.c.l.b16 %v65
    %v111 = vunpack.c.l.b16 %v66
    %v112 = vunpack.c.l.b16 %v67
    %v113 = vunpack.c.l.b16 %v68
    %v114 = vunpack.c.l.b16 %v69
    %v115 = vunpack.c.l.b16 %v70
    %v116 = vunpack.c.l.b16 %v71
    %v117 = vunpack.c.l.b16 %v72
    %v118 = vpack.c.b16 %v103, %v102
    %v119 = vpack.c.b16 %v105, %v104
    %v120 = vpack.c.b16 %v107, %v106
    %v121 = vpack.c.b16 %v109, %v108
    %v122 = vpack.c.b16 %v111, %v110
    %v123 = vpack.c.b16 %v113, %v112
    %v124 = vpack.c.b16 %v115, %v114
    %v125 = vpack.c.b16 %v117, %v116
    %134 = vmatprep.subr.bf16.mxu0 0
    %135 = vmatpush1.bf16.msra.mxu0 %v118
    %136 = vmatprep.subr.bf16.mxu0 0
    %137 = vmatpush1.bf16.msra.mxu0 %v119
    %138 = vmatprep.subr.bf16.mxu0 0
    %139 = vmatpush1.bf16.msra.mxu0 %v120
    %140 = vmatprep.subr.bf16.mxu0 0
    %141 = vmatpush1.bf16.msra.mxu0 %v121
    %142 = vmatprep.subr.bf16.mxu0 0
    %143 = vmatpush1.bf16.msra.mxu0 %v122
    %144 = vmatprep.subr.bf16.mxu0 0
    %145 = vmatpush1.bf16.msra.mxu0 %v123
    %146 = vmatprep.subr.bf16.mxu0 0
    %147 = vmatpush1.bf16.msra.mxu0 %v124
    %148 = vmatprep.subr.bf16.mxu0 0
    %149 = vmatpush1.bf16.msra.mxu0 %v125
    %150 = vmatprep.subr.bf16.mxu0 0
    %151 = vmatpush1.bf16.msra.mxu0 0
    %152 = vmatprep.subr.bf16.mxu0 0
    %153 = vmatpush1.bf16.msra.mxu0 0
    %154 = vmatprep.subr.bf16.mxu0 0
    %155 = vmatpush1.bf16.msra.mxu0 0
    %156 = vmatprep.subr.bf16.mxu0 0
    %157 = vmatpush1.bf16.msra.mxu0 0
    %158 = vmatprep.subr.bf16.mxu0 0
    %159 = vmatpush1.bf16.msra.mxu0 0
    %160 = vmatprep.subr.bf16.mxu0 0
    %161 = vmatpush1.bf16.msra.mxu0 0
    %162 = vmatprep.subr.bf16.mxu0 0
    %163 = vmatpush1.bf16.msra.mxu0 0
    %164 = vmatprep.subr.bf16.mxu0 0
    %165 = vmatpush1.bf16.msra.mxu0 0
    %166 = vmatprep.mubr.bf16.mxu0 0
    %167 = vmatmul.mubr.bf16.gmra.mrb[0].mxu0 %v84
    %v168 = vpop.f32.mrb[0].mxu0
    %v169 = vadd.f32 %v79, %v168
    %v170 = vpop.f32.mrb[0].mxu0
    %v171 = vpop.f32.mrb[0].mxu0
    %v172 = vadd.f32 %v79, %v171
    %v173 = vpop.f32.mrb[0].mxu0
    %174 = vdwg.mxu0
    %175 = vadd.xlane.f32.xlu0 %v169
    %v176 = vpop.xlane.xlu0 %175
    %177 = vadd.xlane.f32.xlu0 %v172
    %v178 = vpop.xlane.xlu0 %177
    %v179 = vrcp.pop 128.0
    %v180 = vmul.f32 %v176, %v179
    %v181 = vmul.f32 %v178, %v179
    %v182 = vsub.f32 %v169, %v180
    %v183 = vsub.f32 %v172, %v181
    %v184 = vmul.f32 %v182, %v182
    %v185 = vmul.f32 %v183, %v183
    %186 = vadd.xlane.f32.xlu0 %v184
    %v187 = vpop.xlane.xlu0 %186
    %188 = vadd.xlane.f32.xlu0 %v185
    %v189 = vpop.xlane.xlu0 %188
    %v190 = vmul.f32 %v187, %v179
    %v191 = vmul.f32 %v189, %v179
    %v192 = vadd.f32 %v190, 1e-05
    %v193 = vadd.f32 %v191, 1e-05
    %v194 = vrsqrt.pop %v192
    %v195 = vrsqrt.pop %v193
    %v196 = vmul.f32 %v182, %v194
    %v197 = vmul.f32 %v183, %v195
    %v198 = vlaneseq
    %v199 = vshrl.u32 %v198, 7
    %v200 = vsub.s32 0, %v199
    %v201 = vrot.slane %v74, %v200
    %v202 = vmul.f32 %v196, %v201
    %v203 = vmul.f32 %v197, %v201
    %v204 = vlaneseq
    %v205 = vshrl.u32 %v204, 7
    %v206 = vsub.s32 0, %v205
    %v207 = vrot.slane %v75, %v206
    %v208 = vadd.f32 %v202, %v207
    %v209 = vadd.f32 %v203, %v207
    %210 = vst [vmem:[#allocation8] sm:$0xff] %v208
    %211 = vst [vmem:[#allocation8 + $0x8] sm:$0xff] %v209
    // Predicated region
    $region26: #{tpu_custom_call.1} parent=1 // pred_check
      _
    $region27: #{tpu_custom_call.1} parent=1 // pred_check_branch
      %213 = sbr.rel (0) target = $region29
    $region28: #{tpu_custom_call.1} parent=1 // pred_region
      %s215 = ssub.s32 256, 256
      %216 = vsyncadd [#allocation4], %s215
      %s217 = sshll.u32 [#allocation8], 4
      %s218 = int_to_ptr.vmem [resolvable:$true] %s217
      %223 = dma.vmem_to_hbm [thread:$0]  %s218, 256, %s3, [#allocation4], 128, 128, 8
    $region29: #{tpu_custom_call.1} parent=1 // pred_fallthru
      _
    // Predicated region
    $region30: #{tpu_custom_call.1} parent=1 // pred_check
      _
    $region31: #{tpu_custom_call.1} parent=1 // pred_check_branch
      %225 = sbr.rel (0) target = $region33
    $region32: #{tpu_custom_call.1} parent=1 // pred_region
      %226 = dma.done [#allocation4], 256
    $region33: #{tpu_custom_call.1} parent=1 // pred_fallthru
      _
    %227 = vsyncpa [#allocation3], 1
    %228 = vsyncpa [#allocation6], 1
    %229 = vsyncpa [#allocation4], 1

</llo_original>
